<compile_context>
chip_gen: v7x
topology: tpu7x:2x2x1
jax: 0.10.0
libtpu: 0.0.40
codegen_flags: <defaults>
</compile_context>

<pallas_src>
import math
import functools

import numpy as np
import jax
import jax.numpy as jnp
from jax.experimental import pallas as pl
from jax.experimental.pallas import tpu as pltpu


# ----------------------------- config (static) -------------------------------
WEIGHT_POWER = 1.0   # cfg.LOSS.WEIGHT_POWER
SCHEDULER = "re_weight"

NUM_CORES = 2  # v7x has 2 TensorCores/chip; on v5e/v6e this axis is a cheap loop.


def make_class_weights(num_class_list, extra_weight, power):
    """Deterministic re-implementation of BaseLoss.reset_epoch ('re_weight')."""
    num_class_list = np.asarray(num_class_list, dtype=np.float64)
    no_of_class = len(num_class_list)
    per_cls = 1.0 / num_class_list
    per_cls = per_cls * np.asarray(extra_weight, dtype=np.float64)
    per_cls = np.array([math.pow(v, power) for v in per_cls])
    per_cls = per_cls / np.sum(per_cls) * no_of_class
    return per_cls.astype(np.float32)


# ------------------------------- Pallas kernel --------------------------------
def cce_kernel(x_ref, tgt_ref, w_ref, num_ref, num_acc, *,
               n_real, tile_n, tiles_per_core, inv_cm1):
    core = pl.program_id(0)   # parallel axis (TensorCore split on v7x)
    step = pl.program_id(1)   # arbitrary axis (batch tiles, carried accumulator)

    @pl.when(step == 0)
    def _init():
        num_acc[...] = jnp.zeros_like(num_acc)

    tn = tile_n
    c = x_ref.shape[1]

    # Row validity for the ragged / clamped tail tiles (uses the UNclamped index).
    row0 = (core * tiles_per_core + step) * tile_n
    row = jax.lax.broadcasted_iota(jnp.int32, (tn, 1), 0) + row0
    row_valid = row < n_real                                          # (tn, 1) bool

    # Upcast in-kernel (input may be bf16).  Garbage rows of a partial block are
    # zeroed BEFORE any exp so no NaN/Inf can ever be produced.
    x = jnp.where(row_valid, x_ref[...].astype(jnp.float32), 0.0)     # (tn, C)
    tgt = tgt_ref[...]                                                # (tn, 1) int32
    w_row = jnp.where(row_valid, w_ref[...].astype(jnp.float32), 0.0)  # (tn, 1)

    col = jax.lax.broadcasted_iota(jnp.int32, (tn, c), 1)
    is_tgt = col == tgt                                               # boolean one-hot

    # Numerically-stable softmax over the (full, unpadded) class dim.
    x_max = jnp.max(x, axis=1, keepdims=True)
    xs = x - x_max
    ex = jnp.exp(xs)
    sum_ex = jnp.sum(ex, axis=1, keepdims=True)
    p = ex * (1.0 / sum_ex)
    log_sum_ex = jnp.log(sum_ex)

    # p[target] and complement normalizer.
    y_g = jnp.sum(jnp.where(is_tgt, p, 0.0), axis=1, keepdims=True)   # (tn, 1)
    ygno = 1.0 - y_g + 1e-7
    log_ygno = jnp.log(ygno)

    # Complement cross entropy: sum_{j != target} p_x * log(p_x) / (C - 1),
    # with the per-element log rewritten row-wise:
    #   log(p_x) = log(p / ygno) = (x - max) - log(sum_ex) - log(ygno)
    # (the +1e-10 inside the reference log only perturbs the product by O(1e-10)).
    p_x = p * (1.0 / ygno)
    log_p_x = xs - log_sum_ex - log_ygno
    cce_row = jnp.sum(jnp.where(is_tgt, 0.0, p_x * log_p_x),
                      axis=1, keepdims=True) * inv_cm1                # (tn, 1)

    # F.cross_entropy applied to the *softmax outputs* (faithful to the reference,
    # which overwrites `pred` with softmax first): logsumexp(p) - p[target].
    # p is in [0, 1] so exp(p) is in [1, e]; no max-subtraction needed.
    lse2 = jnp.log(jnp.sum(jnp.exp(p), axis=1, keepdims=True))
    ce_row = lse2 - y_g

    contrib = (ce_row + cce_row) * w_row      # w_row already 0 on invalid rows
    num_acc[...] += jnp.where(row_valid, contrib, 0.0)

    @pl.when(step == pl.num_programs(1) - 1)
    def _finalize():
        num_ref[...] = jnp.zeros_like(num_ref) + jnp.sum(num_acc[...])


# --------------------------- tiling / VMEM heuristics --------------------------
def _vmem_capacity_bytes():
    try:
        info = pltpu.get_tpu_info()
        cap = int(getattr(info, "vmem_capacity_bytes", 0) or 0)
        if cap > 0:
            return cap
    except Exception:
        pass
    return 64 * 1024 * 1024   # conservative fallback: v7x has the smallest VMEM/TC


def _choose_tiling(n, c):
    """Pick (tile_n, vmem_limit_bytes), generation-aware via VMEM capacity."""
    vmem_cap = _vmem_capacity_bytes()
    small_vmem = vmem_cap <= 64 * 1024 * 1024            # v7x (64 MiB per TensorCore)
    # f32 working-set budget for one logits tile; keeps the double-buffered input
    # block plus the handful of full-tile f32 intermediates (ex / p / exp(p))
    # comfortably under the scoped VMEM limit below.
    block_budget = (4 if small_vmem else 8) * 1024 * 1024
    tile_n = block_budget // (4 * max(c, 1))
    tile_n = int(max(8, min(tile_n, 4096)))
    tile_n = (tile_n // 8) * 8
    # no point in a tile larger than each core's (8-rounded) share of the batch
    per_core_rows = (((n + NUM_CORES - 1) // NUM_CORES) + 7) // 8 * 8
    tile_n = min(tile_n, max(8, per_core_rows))
    vmem_limit = (48 if small_vmem else 96) * 1024 * 1024
    return tile_n, vmem_limit


# --------------------------------- wrapper --------------------------------------
def cce_loss(x, target, class_weights, *, tile_n=None):
    """x: (N, C) logits (any float dtype, passed through un-copied),
    target: (N,) int labels, class_weights: (C,) float per-class weights."""
    N, C = x.shape
    auto_tile, vmem_limit = _choose_tiling(N, C)
    if tile_n is None:
        tile_n = auto_tile
    else:
        tile_n = max(8, (int(tile_n) // 8) * 8)

    total_tiles = -(-N // tile_n)                       # cdiv
    tiles_per_core = max(1, -(-total_tiles // NUM_CORES))

    # Tiny O(N) side inputs: label column and gathered per-sample class weight.
    tgt2d = target.astype(jnp.int32).reshape(N, 1)
    w_tgt = jnp.take(class_weights.astype(jnp.float32), target, axis=0)  # weight[target]
    w2d = w_tgt.reshape(N, 1)

    def row_block_map(c_idx, i):
        # Clamp so a core's empty tail steps re-read the last valid block; those
        # rows are masked out inside the kernel via row_valid (unclamped index).
        return (jnp.minimum(c_idx * tiles_per_core + i, total_tiles - 1), 0)

    kernel = functools.partial(
        cce_kernel, n_real=N, tile_n=tile_n, tiles_per_core=tiles_per_core,
        inv_cm1=1.0 / (C - 1))

    partials = pl.pallas_call(
        kernel,
        out_shape=jax.ShapeDtypeStruct((NUM_CORES, 8, 128), jnp.float32),
        grid_spec=pltpu.PrefetchScalarGridSpec(
            num_scalar_prefetch=0,
            grid=(NUM_CORES, tiles_per_core),
            in_specs=[
                pl.BlockSpec((tile_n, C), row_block_map),   # logits tile (no HBM copy)
                pl.BlockSpec((tile_n, 1), row_block_map),   # labels tile
                pl.BlockSpec((tile_n, 1), row_block_map),   # weight[target] tile
            ],
            out_specs=pl.BlockSpec((1, 8, 128), lambda c_idx, i: (c_idx, 0, 0)),
            scratch_shapes=[
                pltpu.VMEM((tile_n, 1), jnp.float32),       # running per-row numerator
            ],
        ),
        compiler_params=pltpu.CompilerParams(
            dimension_semantics=("parallel", "arbitrary"),  # core split / carried acc
            vmem_limit_bytes=int(vmem_limit),
        ),
    )(x, tgt2d, w2d)

    numerator = jnp.sum(partials[:, 0, 0])   # combine per-core partial sums
    denominator = jnp.sum(w_tgt)             # == weights.sum() in the reference
    return numerator / denominator


# ------------------------------ pure-JAX reference -----------------------------
def cce_loss_ref(x, target, class_weights):
    N, C = x.shape
    y = jax.nn.one_hot(target, C, dtype=jnp.float32)
    w = jnp.sum(class_weights[None, :] * y, axis=1)                   # weight[target]
    p = jax.nn.softmax(x.astype(jnp.float32), axis=1)
    y_g = jnp.take_along_axis(p, target[:, None], axis=1)             # (N, 1)
    y_g_no = 1.0 - y_g + 1e-7
    p_x = p / y_g_no
    p_x_log = jnp.log(p_x + 1e-10)
    cce = jnp.sum(p_x * p_x_log * (1.0 - y), axis=1) / (C - 1)
    ce = jax.scipy.special.logsumexp(p, axis=1) - y_g[:, 0]           # CE on softmax outputs
    wl = (ce + cce) * w
    return jnp.sum(wl) / jnp.sum(w)


# ----------------------------------- main --------------------------------------
if __name__ == "__main__":
    N, C = 20, 16  # batch, num_classes (small test shapes)

    # Deterministic imbalanced class counts -> per-class weights ('re_weight' scheduler)
    num_class_list = [200, 150, 120, 100, 80, 70, 60, 50,
                      40, 35, 30, 25, 20, 15, 10, 5]
    extra_weight = [1.0] * C
    class_weights = jnp.asarray(
        make_class_weights(num_class_list, extra_weight, WEIGHT_POWER))

    key = jax.random.PRNGKey(0)
    kx, kt = jax.random.split(key)
    x = jax.random.normal(kx, (N, C), dtype=jnp.float32) * 2.0
    target = jax.random.randint(kt, (N,), 0, C, dtype=jnp.int32)

    # tile_n=8 forces a multi-step grid with a ragged last tile AND exercises the
    # core-split / clamped-tail path; real sizes pick the tile automatically.
    out = cce_loss(x, target, class_weights, tile_n=8)
    out = jax.block_until_ready(out)

    ref = jax.block_until_ready(cce_loss_ref(x, target, class_weights))
    assert np.allclose(np.asarray(out), np.asarray(ref), rtol=1e-5, atol=1e-5), (out, ref)

    print("KERNEL_OK")
</pallas_src>

<mosaic_0001>
module attributes {stable_mosaic.version = 11 : i64} {
  func.func @cce_kernel(%arg0: i32, %arg1: i32, %arg2: memref<8x16xf32, #tpu.memory_space<vmem>>, %arg3: memref<8x1xi32, #tpu.memory_space<vmem>>, %arg4: memref<8x1xf32, #tpu.memory_space<vmem>>, %arg5: memref<1x8x128xf32, #tpu.memory_space<vmem>>, %arg6: memref<8x1xf32, #tpu.memory_space<vmem>>) attributes {dimension_semantics = [#tpu.dimension_semantics<parallel>, #tpu.dimension_semantics<arbitrary>], iteration_bounds = array<i64: 2, 2>, scalar_prefetch = 0 : i64, scratch_operands = 1 : i64, tpu.core_type = #tpu.core_type<tc>, window_params = [{transform_indices = @transform_0, window_bounds = array<i64: 8, 16>}, {transform_indices = @transform_1, window_bounds = array<i64: 8, 1>}, {transform_indices = @transform_2, window_bounds = array<i64: 8, 1>}, {transform_indices = @transform_3, window_bounds = array<i64: 1, 8, 128>}]} {
    %c0_i32 = arith.constant 0 : i32
    %0 = arith.cmpi eq, %arg1, %c0_i32 : i32
    %1 = arith.extui %0 : i1 to i32
    %c0_i32_0 = arith.constant 0 : i32
    %2 = arith.cmpi ne, %1, %c0_i32_0 : i32
    scf.if %2 {
      %cst_25 = arith.constant 0.000000e+00 : f32
      %74 = vector.broadcast %cst_25 : f32 to vector<8x1xf32>
      %c0_26 = arith.constant 0 : index
      %c0_27 = arith.constant 0 : index
      %75 = vector.load %arg6[%c0_26, %c0_27] : memref<8x1xf32, #tpu.memory_space<vmem>>, vector<8x1xf32>
      tpu.vector_store %arg6[%c0_26, %c0_27], %74 {strides = array<i32>} : memref<8x1xf32, #tpu.memory_space<vmem>>, vector<8x1xf32>,
    } else {
    }
    %c2_i32 = arith.constant 2 : i32
    %3 = arith.muli %arg0, %c2_i32 : i32
    %4 = arith.addi %3, %arg1 : i32
    %c8_i32 = arith.constant 8 : i32
    %5 = arith.muli %4, %c8_i32 : i32
    %6 = tpu.iota {dimensions = array<i32: 0>} : vector<8x1xi32>
    %7 = vector.broadcast %5 : i32 to vector<8x1xi32>
    %8 = arith.addi %6, %7 : vector<8x1xi32>
    %c20_i32 = arith.constant 20 : i32
    %9 = vector.broadcast %c20_i32 : i32 to vector<8x1xi32>
    %10 = arith.cmpi slt, %8, %9 : vector<8x1xi32>
    %c0 = arith.constant 0 : index
    %c0_1 = arith.constant 0 : index
    %11 = vector.load %arg2[%c0, %c0_1] : memref<8x16xf32, #tpu.memory_space<vmem>>, vector<8x16xf32>
    %cst = arith.constant 0.000000e+00 : f32
    %12 = vector.shape_cast %10 : vector<8x1xi1> to vector<8x1xi1>
    %13 = vector.broadcast %12 : vector<8x1xi1> to vector<8x16xi1>
    %14 = vector.broadcast %cst : f32 to vector<8x16xf32>
    %15 = arith.select %13, %11, %14 : vector<8x16xi1>, vector<8x16xf32>
    %c0_2 = arith.constant 0 : index
    %c0_3 = arith.constant 0 : index
    %16 = vector.load %arg3[%c0_2, %c0_3] : memref<8x1xi32, #tpu.memory_space<vmem>>, vector<8x1xi32>
    %c0_4 = arith.constant 0 : index
    %c0_5 = arith.constant 0 : index
    %17 = vector.load %arg4[%c0_4, %c0_5] : memref<8x1xf32, #tpu.memory_space<vmem>>, vector<8x1xf32>
    %cst_6 = arith.constant 0.000000e+00 : f32
    %18 = vector.broadcast %cst_6 : f32 to vector<8x1xf32>
    %19 = arith.select %10, %17, %18 : vector<8x1xi1>, vector<8x1xf32>
    %20 = tpu.iota {dimensions = array<i32: 1>} : vector<8x16xi32>
    %21 = vector.broadcast %16 : vector<8x1xi32> to vector<8x16xi32>
    %22 = arith.cmpi eq, %20, %21 : vector<8x16xi32>
    %cst_7 = arith.constant dense<0xFF800000> : vector<8xf32>
    %23 = vector.multi_reduction <maximumf>, %15, %cst_7 [1] : vector<8x16xf32> to vector<8xf32>
    %24 = vector.shape_cast %23 : vector<8xf32> to vector<8x1xf32>
    %25 = vector.broadcast %24 : vector<8x1xf32> to vector<8x16xf32>
    %26 = arith.subf %15, %25 : vector<8x16xf32>
    %27 = math.exp %26 : vector<8x16xf32>
    %cst_8 = arith.constant dense<0.000000e+00> : vector<8xf32>
    %28 = vector.multi_reduction <add>, %27, %cst_8 [1] : vector<8x16xf32> to vector<8xf32>
    %29 = vector.shape_cast %28 : vector<8xf32> to vector<8x1xf32>
    %cst_9 = arith.constant 1.000000e+00 : f32
    %30 = vector.broadcast %cst_9 : f32 to vector<8x1xf32>
    %31 = arith.divf %30, %29 : vector<8x1xf32>
    %32 = vector.broadcast %31 : vector<8x1xf32> to vector<8x16xf32>
    %33 = arith.mulf %27, %32 : vector<8x16xf32>
    %34 = math.log %29 : vector<8x1xf32>
    %cst_10 = arith.constant 0.000000e+00 : f32
    %35 = vector.broadcast %cst_10 : f32 to vector<8x16xf32>
    %36 = arith.select %22, %33, %35 : vector<8x16xi1>, vector<8x16xf32>
    %cst_11 = arith.constant dense<0.000000e+00> : vector<8xf32>
    %37 = vector.multi_reduction <add>, %36, %cst_11 [1] : vector<8x16xf32> to vector<8xf32>
    %38 = vector.shape_cast %37 : vector<8xf32> to vector<8x1xf32>
    %cst_12 = arith.constant 1.000000e+00 : f32
    %39 = vector.broadcast %cst_12 : f32 to vector<8x1xf32>
    %40 = arith.subf %39, %38 : vector<8x1xf32>
    %cst_13 = arith.constant 1.000000e-07 : f32
    %41 = vector.broadcast %cst_13 : f32 to vector<8x1xf32>
    %42 = arith.addf %40, %41 : vector<8x1xf32>
    %43 = math.log %42 : vector<8x1xf32>
    %cst_14 = arith.constant 1.000000e+00 : f32
    %44 = vector.broadcast %cst_14 : f32 to vector<8x1xf32>
    %45 = arith.divf %44, %42 : vector<8x1xf32>
    %46 = vector.broadcast %45 : vector<8x1xf32> to vector<8x16xf32>
    %47 = arith.mulf %33, %46 : vector<8x16xf32>
    %48 = vector.broadcast %34 : vector<8x1xf32> to vector<8x16xf32>
    %49 = arith.subf %26, %48 : vector<8x16xf32>
    %50 = vector.broadcast %43 : vector<8x1xf32> to vector<8x16xf32>
    %51 = arith.subf %49, %50 : vector<8x16xf32>
    %52 = arith.mulf %47, %51 : vector<8x16xf32>
    %cst_15 = arith.constant 0.000000e+00 : f32
    %53 = vector.broadcast %cst_15 : f32 to vector<8x16xf32>
    %54 = arith.select %22, %53, %52 : vector<8x16xi1>, vector<8x16xf32>
    %cst_16 = arith.constant dense<0.000000e+00> : vector<8xf32>
    %55 = vector.multi_reduction <add>, %54, %cst_16 [1] : vector<8x16xf32> to vector<8xf32>
    %56 = vector.shape_cast %55 : vector<8xf32> to vector<8x1xf32>
    %cst_17 = arith.constant 0.0666666701 : f32
    %57 = vector.broadcast %cst_17 : f32 to vector<8x1xf32>
    %58 = arith.mulf %56, %57 : vector<8x1xf32>
    %59 = math.exp %33 : vector<8x16xf32>
    %cst_18 = arith.constant dense<0.000000e+00> : vector<8xf32>
    %60 = vector.multi_reduction <add>, %59, %cst_18 [1] : vector<8x16xf32> to vector<8xf32>
    %61 = vector.shape_cast %60 : vector<8xf32> to vector<8x1xf32>
    %62 = math.log %61 : vector<8x1xf32>
    %63 = arith.subf %62, %38 : vector<8x1xf32>
    %64 = arith.addf %63, %58 : vector<8x1xf32>
    %65 = arith.mulf %64, %19 : vector<8x1xf32>
    %c0_19 = arith.constant 0 : index
    %c0_20 = arith.constant 0 : index
    %66 = vector.load %arg6[%c0_19, %c0_20] : memref<8x1xf32, #tpu.memory_space<vmem>>, vector<8x1xf32>
    %cst_21 = arith.constant 0.000000e+00 : f32
    %67 = vector.broadcast %cst_21 : f32 to vector<8x1xf32>
    %68 = arith.select %10, %65, %67 : vector<8x1xi1>, vector<8x1xf32>
    %69 = arith.addf %66, %68 : vector<8x1xf32>
    %c0_22 = arith.constant 0 : index
    %c0_23 = arith.constant 0 : index
    %70 = vector.load %arg6[%c0_22, %c0_23] : memref<8x1xf32, #tpu.memory_space<vmem>>, vector<8x1xf32>
    tpu.vector_store %arg6[%c0_22, %c0_23], %69 {strides = array<i32>} : memref<8x1xf32, #tpu.memory_space<vmem>>, vector<8x1xf32>,
    %c1_i32 = arith.constant 1 : i32
    %71 = arith.cmpi eq, %arg1, %c1_i32 : i32
    %72 = arith.extui %71 : i1 to i32
    %c0_i32_24 = arith.constant 0 : i32
    %73 = arith.cmpi ne, %72, %c0_i32_24 : i32
    scf.if %73 {
      %cst_25 = arith.constant 0.000000e+00 : f32
      %74 = vector.broadcast %cst_25 : f32 to vector<1x8x128xf32>
      %c0_26 = arith.constant 0 : index
      %c0_27 = arith.constant 0 : index
      %75 = vector.load %arg6[%c0_26, %c0_27] : memref<8x1xf32, #tpu.memory_space<vmem>>, vector<8x1xf32>
      %76 = vector.shape_cast %75 : vector<8x1xf32> to vector<1x8x1xf32>
      %cst_28 = arith.constant dense<0.000000e+00> : vector<1xf32>
      %77 = vector.multi_reduction <add>, %76, %cst_28 [1, 2] : vector<1x8x1xf32> to vector<1xf32>
      %78 = vector.shape_cast %77 : vector<1xf32> to vector<1x1x1xf32>
      %79 = vector.extract %78[0, 0, 0] : f32 from vector<1x1x1xf32>
      %80 = vector.broadcast %79 : f32 to vector<1x8x128xf32>
      %81 = arith.addf %74, %80 : vector<1x8x128xf32>
      %c0_29 = arith.constant 0 : index
      %c0_30 = arith.constant 0 : index
      %c0_31 = arith.constant 0 : index
      %82 = vector.load %arg5[%c0_29, %c0_30, %c0_31] : memref<1x8x128xf32, #tpu.memory_space<vmem>>, vector<1x8x128xf32>
      tpu.vector_store %arg5[%c0_29, %c0_30, %c0_31], %81 {strides = array<i32>} : memref<1x8x128xf32, #tpu.memory_space<vmem>>, vector<1x8x128xf32>,
    } else {
    }
    return
  }
  func.func @transform_0(%arg0: i32, %arg1: i32) -> (i32, i32) {
    %c2_i32 = arith.constant 2 : i32
    %0 = arith.muli %arg0, %c2_i32 : i32
    %1 = arith.addi %0, %arg1 : i32
    %c2_i32_0 = arith.constant 2 : i32
    %2 = arith.minsi %1, %c2_i32_0 : i32
    %c0_i32 = arith.constant 0 : i32
    %c0_i32_1 = arith.constant 0 : i32
    return %2, %c0_i32 : i32, i32
  }
  func.func @transform_1(%arg0: i32, %arg1: i32) -> (i32, i32) {
    %c2_i32 = arith.constant 2 : i32
    %0 = arith.muli %arg0, %c2_i32 : i32
    %1 = arith.addi %0, %arg1 : i32
    %c2_i32_0 = arith.constant 2 : i32
    %2 = arith.minsi %1, %c2_i32_0 : i32
    %c0_i32 = arith.constant 0 : i32
    %c0_i32_1 = arith.constant 0 : i32
    return %2, %c0_i32 : i32, i32
  }
  func.func @transform_2(%arg0: i32, %arg1: i32) -> (i32, i32) {
    %c2_i32 = arith.constant 2 : i32
    %0 = arith.muli %arg0, %c2_i32 : i32
    %1 = arith.addi %0, %arg1 : i32
    %c2_i32_0 = arith.constant 2 : i32
    %2 = arith.minsi %1, %c2_i32_0 : i32
    %c0_i32 = arith.constant 0 : i32
    %c0_i32_1 = arith.constant 0 : i32
    return %2, %c0_i32 : i32, i32
  }
  func.func @transform_3(%arg0: i32, %arg1: i32) -> (i32, i32, i32) {
    %c0_i32 = arith.constant 0 : i32
    %c0_i32_0 = arith.constant 0 : i32
    %c0_i32_1 = arith.constant 0 : i32
    return %arg0, %c0_i32, %c0_i32_0 : i32, i32, i32
  }
}

</mosaic_0001>

<llo_original>
// kernel: tpu_custom_call.1
$region0: #{tpu_custom_call.1}
  #allocation0 [shape = 'u32[]', space=smem, size = 0x4, offset = 0x4, fixed_abs, tag = 'smem constant byte address 0x4 - core index']
  #allocation1 [shape = 'u32[144,128]{1,0:T(1,128)}', space=vmem, size = 0x12000, scoped, tag = 'internal scratch']
  #allocation2 [shape = 'f32[8,1]{1,0:T(8,128)}', space=vmem, size = 0x1000, scoped, tag = 'scratch operand']
  %s0 = inlined_call_operand.vmem [shape: f32[20,16], index: 0, kind: input, shape index: {}]
  %s1 = inlined_call_operand.vmem [shape: s32[20,1], index: 1, kind: input, shape index: {}]
  %s2 = inlined_call_operand.vmem [shape: f32[20,1], index: 2, kind: input, shape index: {}]
  %s3 = inlined_call_operand.hbm [shape: f32[2,8,128], index: 3, kind: output, shape index: {}]
  %s4 = sld [smem:[#allocation0]]
  $region53: #{tpu_custom_call.1} parent=0
    _
  %s6 = ssub.s32 1, %s4
  %s7 = scalar_select 0, %s6, %s4
  $region1: #{tpu_custom_call.1} parent=0
    #allocation3 [shape = 'u8[8192]{0}', space=vmem, size = 0x2000, scoped, tag = 'output window, operand 0']
    #allocation4 [shape = 's32[2]{0}', space=sflag, size = 0x8, scoped, tag = 'scoped memory for tpu_custom_call.1']
    %8 = vsyncpa [#allocation4], 0
    %s9 = scalar_lea.sflag [#allocation4], 1
    %10 = vsyncpa %s9, 0
    loop: start=0, step=1, limit=6
    $region2: #{tpu_custom_call.1} parent=1 // loop_pre_header
      _
    $region3: #{tpu_custom_call.1} parent=1 // loop_header
      %s12 = sphi 0, %s16
      %p13 = scmp.ge.s32.totalorder %s12, 6
      %s19 = sphi 0, %s31
      %s20 = sphi 0, %s27
      %s21 = sphi 0, %s19
      %s22 = sphi 0, %s20
      %s23 = sphi 0, %s21
      %s24 = sphi 0, %s22
      %s42 = sphi 0, %s44
      %s45 = sphi 0, %s42
      %s46 = sphi 0, %s45
      %s62 = sphi 0, %s46
      %s76 = sphi 0, %s78
      %s79 = sphi 0, %s76
      %s80 = sphi 0, %s79
      %s96 = sphi 0, %s80
      %s110 = sphi 0, %s112
      %s113 = sphi 0, %s110
      %s114 = sphi 0, %s113
      %s130 = sphi 0, %s114
      %s136 = sphi 0, %s138
      %s139 = sphi 0, %s136
      %s140 = sphi 0, %s139
      %s156 = sphi 0, %s140
    $region4: #{tpu_custom_call.1} parent=1 // loop_header_branch
      %15 = sbr.rel (%p13) target = $region8
    $region5: #{tpu_custom_call.1} parent=1 // loop_body
      %s17 = ssub.s32 %s12, 1
      %s18 = ssub.s32 %s12, 2
      %s25 = sadd.s32 1, %s20
      %p26 = scmp.ge.s32.totalorder %s25, 2
      %s27 = scalar_select %p26, 0, %s25
      %s28 = sadd.s32 1, %s19
      %s29 = scalar_select %p26, %s28, %s19
      %p30 = scmp.ge.s32.totalorder %s29, 2
      %s31 = scalar_select %p30, 0, %s29
      %s32 = smul.u32 %s19, 2
      %s33 = sadd.s32 %s32, %s20
      %p34 = scmp.lt.s32.totalorder %s33, 2
      %s35 = scalar_select %p34, %s33, 2
      %s36 = smul.u32 %s31, 2
      %s37 = sadd.s32 %s36, %s27
      %p38 = scmp.lt.s32.totalorder %s37, 2
      %s39 = scalar_select %p38, %s37, 2
      %s40 = ssub.s32 %s35, %s39
      %p41 = scmp.eq.s32.totalorder %s40, 0
      %s43 = sadd.s32 %s42, 1
      %s44 = scalar_select %p41, %s42, %s43
      %p47 = pneg %p41
      %p48 = scmp.eq.s32.totalorder %s12, 3
      %p49 = por %p47, %p48
      %p50 = scmp.ne.s32.totalorder %s42, %s45
      %p51 = scmp.eq.s32.totalorder %s12, 0
      %p52 = por %p50, %p51
      %p53 = scmp.ne.s32.totalorder %s42, %s45
      %p54 = scmp.eq.s32.totalorder %s17, 3
      %p55 = por %p53, %p54
      %p56 = scmp.ne.s32.totalorder %s45, %s46
      %p57 = scmp.eq.s32.totalorder %s17, 0
      %p58 = por %p56, %p57
      %p59 = scmp.ne.s32.totalorder %s45, %s46
      %p60 = scmp.eq.s32.totalorder %s18, 3
      %p61 = por %p59, %p60
      %p63 = scmp.ne.s32.totalorder %s46, %s62
      %p64 = scmp.eq.s32.totalorder %s18, 0
      %p65 = por %p63, %p64
      %s66 = smul.u32 %s19, 2
      %s67 = sadd.s32 %s66, %s20
      %p68 = scmp.lt.s32.totalorder %s67, 2
      %s69 = scalar_select %p68, %s67, 2
      %s70 = smul.u32 %s31, 2
      %s71 = sadd.s32 %s70, %s27
      %p72 = scmp.lt.s32.totalorder %s71, 2
      %s73 = scalar_select %p72, %s71, 2
      %s74 = ssub.s32 %s69, %s73
      %p75 = scmp.eq.s32.totalorder %s74, 0
      %s77 = sadd.s32 %s76, 1
      %s78 = scalar_select %p75, %s76, %s77
      %p81 = pneg %p75
      %p82 = scmp.eq.s32.totalorder %s12, 3
      %p83 = por %p81, %p82
      %p84 = scmp.ne.s32.totalorder %s76, %s79
      %p85 = scmp.eq.s32.totalorder %s12, 0
      %p86 = por %p84, %p85
      %p87 = scmp.ne.s32.totalorder %s76, %s79
      %p88 = scmp.eq.s32.totalorder %s17, 3
      %p89 = por %p87, %p88
      %p90 = scmp.ne.s32.totalorder %s79, %s80
      %p91 = scmp.eq.s32.totalorder %s17, 0
      %p92 = por %p90, %p91
      %p93 = scmp.ne.s32.totalorder %s79, %s80
      %p94 = scmp.eq.s32.totalorder %s18, 3
      %p95 = por %p93, %p94
      %p97 = scmp.ne.s32.totalorder %s80, %s96
      %p98 = scmp.eq.s32.totalorder %s18, 0
      %p99 = por %p97, %p98
      %s100 = smul.u32 %s19, 2
      %s101 = sadd.s32 %s100, %s20
      %p102 = scmp.lt.s32.totalorder %s101, 2
      %s103 = scalar_select %p102, %s101, 2
      %s104 = smul.u32 %s31, 2
      %s105 = sadd.s32 %s104, %s27
      %p106 = scmp.lt.s32.totalorder %s105, 2
      %s107 = scalar_select %p106, %s105, 2
      %s108 = ssub.s32 %s103, %s107
      %p109 = scmp.eq.s32.totalorder %s108, 0
      %s111 = sadd.s32 %s110, 1
      %s112 = scalar_select %p109, %s110, %s111
      %p115 = pneg %p109
      %p116 = scmp.eq.s32.totalorder %s12, 3
      %p117 = por %p115, %p116
      %p118 = scmp.ne.s32.totalorder %s110, %s113
      %p119 = scmp.eq.s32.totalorder %s12, 0
      %p120 = por %p118, %p119
      %p121 = scmp.ne.s32.totalorder %s110, %s113
      %p122 = scmp.eq.s32.totalorder %s17, 3
      %p123 = por %p121, %p122
      %p124 = scmp.ne.s32.totalorder %s113, %s114
      %p125 = scmp.eq.s32.totalorder %s17, 0
      %p126 = por %p124, %p125
      %p127 = scmp.ne.s32.totalorder %s113, %s114
      %p128 = scmp.eq.s32.totalorder %s18, 3
      %p129 = por %p127, %p128
      %p131 = scmp.ne.s32.totalorder %s114, %s130
      %p132 = scmp.eq.s32.totalorder %s18, 0
      %p133 = por %p131, %p132
      %s134 = ssub.s32 %s19, %s31
      %p135 = scmp.eq.s32.totalorder %s134, 0
      %s137 = sadd.s32 %s136, 1
      %s138 = scalar_select %p135, %s136, %s137
      %p141 = pneg %p135
      %p142 = scmp.eq.s32.totalorder %s12, 3
      %p143 = por %p141, %p142
      %p144 = scmp.ne.s32.totalorder %s136, %s139
      %p145 = scmp.eq.s32.totalorder %s12, 0
      %p146 = por %p144, %p145
      %p147 = scmp.ne.s32.totalorder %s136, %s139
      %p148 = scmp.eq.s32.totalorder %s17, 3
      %p149 = por %p147, %p148
      %p150 = scmp.ne.s32.totalorder %s139, %s140
      %p151 = scmp.eq.s32.totalorder %s17, 0
      %p152 = por %p150, %p151
      %p153 = scmp.ne.s32.totalorder %s139, %s140
      %p154 = scmp.eq.s32.totalorder %s18, 3
      %p155 = por %p153, %p154
      %p157 = scmp.ne.s32.totalorder %s140, %s156
      %p158 = scmp.eq.s32.totalorder %s18, 0
      %p159 = por %p157, %p158
      %p160 = scmp.le.s32.totalorder 1, %s12
      %p161 = scmp.lt.s32.totalorder %s12, 5
      %p162 = pnand %p160, %p161
      %p163 = pneg %p162
      // Predicated region
      $region9: #{tpu_custom_call.1} parent=5 // pred_check
        _
      $region10: #{tpu_custom_call.1} parent=5 // pred_check_branch
        %165 = sbr.rel (%p162) target = $region12
      $region11: #{tpu_custom_call.1} parent=5 // pred_region
        %s166 = ssub.s32 %s12, 1
      $region12: #{tpu_custom_call.1} parent=5 // pred_fallthru
        _
      %p167 = scmp.lt.s32.totalorder %s12, 4
      // Predicated region
      $region13: #{tpu_custom_call.1} parent=5 // pred_check
        %p168 = pneg %p167
      $region14: #{tpu_custom_call.1} parent=5 // pred_check_branch
        %170 = sbr.rel (%p168) target = $region16
      $region15: #{tpu_custom_call.1} parent=5 // pred_region
        // Predicated region
        $region17: #{tpu_custom_call.1} parent=15 // pred_check
          %p171 = pneg %p52
        $region18: #{tpu_custom_call.1} parent=15 // pred_check_branch
          %173 = sbr.rel (%p171) target = $region20
        $region19: #{tpu_custom_call.1} parent=15 // pred_region
          %s174 = smul.u32 %s19, 2
          %s175 = sadd.s32 %s174, %s20
          %p176 = scmp.lt.s32.totalorder %s175, 2
          %s177 = scalar_select %p176, %s175, 2
          %p178 = scmp.lt.s32.totalorder %s177, 2
          %s179 = scalar_select %p178, %s177, 2
          %s180 = smul.addr %s179, 8
          %s181 = scalar_lea.vmem %s0, %s180
          %s182 = smul.u32 %s19, 2
          %s183 = sadd.s32 %s182, %s20
          %p184 = scmp.lt.s32.totalorder %s183, 2
          %s185 = scalar_select %p184, %s183, 2
        $region20: #{tpu_custom_call.1} parent=15 // pred_fallthru
          _
        // Predicated region
        $region21: #{tpu_custom_call.1} parent=15 // pred_check
          %p186 = pneg %p86
        $region22: #{tpu_custom_call.1} parent=15 // pred_check_branch
          %188 = sbr.rel (%p186) target = $region24
        $region23: #{tpu_custom_call.1} parent=15 // pred_region
          %s189 = smul.u32 %s19, 2
          %s190 = sadd.s32 %s189, %s20
          %p191 = scmp.lt.s32.totalorder %s190, 2
          %s192 = scalar_select %p191, %s190, 2
          %p193 = scmp.lt.s32.totalorder %s192, 2
          %s194 = scalar_select %p193, %s192, 2
          %s195 = smul.addr %s194, 8
          %s196 = scalar_lea.vmem %s1, %s195
          %s197 = smul.u32 %s19, 2
          %s198 = sadd.s32 %s197, %s20
          %p199 = scmp.lt.s32.totalorder %s198, 2
          %s200 = scalar_select %p199, %s198, 2
        $region24: #{tpu_custom_call.1} parent=15 // pred_fallthru
          _
        // Predicated region
        $region25: #{tpu_custom_call.1} parent=15 // pred_check
          %p201 = pneg %p120
        $region26: #{tpu_custom_call.1} parent=15 // pred_check_branch
          %203 = sbr.rel (%p201) target = $region28
        $region27: #{tpu_custom_call.1} parent=15 // pred_region
          %s204 = smul.u32 %s19, 2
          %s205 = sadd.s32 %s204, %s20
          %p206 = scmp.lt.s32.totalorder %s205, 2
          %s207 = scalar_select %p206, %s205, 2
          %p208 = scmp.lt.s32.totalorder %s207, 2
          %s209 = scalar_select %p208, %s207, 2
          %s210 = smul.addr %s209, 8
          %s211 = scalar_lea.vmem %s2, %s210
          %s212 = smul.u32 %s19, 2
          %s213 = sadd.s32 %s212, %s20
          %p214 = scmp.lt.s32.totalorder %s213, 2
          %s215 = scalar_select %p214, %s213, 2
        $region28: #{tpu_custom_call.1} parent=15 // pred_fallthru
          _
      $region16: #{tpu_custom_call.1} parent=5 // pred_fallthru
        _
      %p216 = scmp.le.s32.totalorder 1, %s12
      %p217 = scmp.lt.s32.totalorder %s12, 5
      %p218 = pnand %p216, %p217
      %p219 = pneg %p218
      // Predicated region
      $region29: #{tpu_custom_call.1} parent=5 // pred_check
        _
      $region30: #{tpu_custom_call.1} parent=5 // pred_check_branch
        %221 = sbr.rel (%p218) target = $region32
      $region31: #{tpu_custom_call.1} parent=5 // pred_region
        %s222 = ssub.s32 %s12, 1
        %s223 = smul.u32 %s21, 2
        %s224 = sadd.s32 %s223, %s22
        %p225 = scmp.lt.s32.totalorder %s224, 2
        %s226 = scalar_select %p225, %s224, 2
        %p227 = scmp.lt.s32.totalorder %s226, 2
        %s228 = scalar_select %p227, %s226, 2
        %s229 = smul.addr %s228, 8
        %s230 = scalar_lea.vmem %s0, %s229
        %p231 = pneg %p58
        %p232 = pneg %p55
        %s233 = smul.u32 %s21, 2
        %s234 = sadd.s32 %s233, %s22
        %p235 = scmp.lt.s32.totalorder %s234, 2
        %s236 = scalar_select %p235, %s234, 2
        %p237 = scmp.lt.s32.totalorder %s236, 2
        %s238 = scalar_select %p237, %s236, 2
        %s239 = smul.addr %s238, 8
        %s240 = scalar_lea.vmem %s1, %s239
        %p241 = pneg %p92
        %p242 = pneg %p89
        %s243 = smul.u32 %s21, 2
        %s244 = sadd.s32 %s243, %s22
        %p245 = scmp.lt.s32.totalorder %s244, 2
        %s246 = scalar_select %p245, %s244, 2
        %p247 = scmp.lt.s32.totalorder %s246, 2
        %s248 = scalar_select %p247, %s246, 2
        %s249 = smul.addr %s248, 8
        %s250 = scalar_lea.vmem %s2, %s249
        %p251 = pneg %p126
        %p252 = pneg %p123
        %p253 = pneg %p152
        %p254 = pneg %p149
        %s255 = sand.u32 %s139, 1
        %s256 = scalar_lea.sflag [#allocation4], %s255
        %s257 = sand.u32 %s139, 1
        %s258 = smul.addr %s257, 8
        %s259 = scalar_lea.vmem [#allocation3], %s258
        %s260 = smul.u32 %s21, 2
        %s261 = sadd.s32 %s260, %s22
        %p262 = scmp.lt.s32.totalorder %s261, 2
        %s263 = scalar_select %p262, %s261, 2
        %p264 = scmp.lt.s32.totalorder %s263, 2
        %s265 = scalar_select %p264, %s263, 2
        %s266 = smul.addr %s265, 8
        %s267 = scalar_lea.vmem %s0, %s266
        %s268 = smul.u32 %s21, 2
        %s269 = sadd.s32 %s268, %s22
        %p270 = scmp.lt.s32.totalorder %s269, 2
        %s271 = scalar_select %p270, %s269, 2
        %s272 = smul.u32 %s21, 2
        %s273 = sadd.s32 %s272, %s22
        %p274 = scmp.lt.s32.totalorder %s273, 2
        %s275 = scalar_select %p274, %s273, 2
        %p276 = scmp.lt.s32.totalorder %s275, 2
        %s277 = scalar_select %p276, %s275, 2
        %s278 = smul.addr %s277, 8
        %s279 = scalar_lea.vmem %s1, %s278
        %s280 = smul.u32 %s21, 2
        %s281 = sadd.s32 %s280, %s22
        %p282 = scmp.lt.s32.totalorder %s281, 2
        %s283 = scalar_select %p282, %s281, 2
        %s284 = smul.u32 %s21, 2
        %s285 = sadd.s32 %s284, %s22
        %p286 = scmp.lt.s32.totalorder %s285, 2
        %s287 = scalar_select %p286, %s285, 2
        %p288 = scmp.lt.s32.totalorder %s287, 2
        %s289 = scalar_select %p288, %s287, 2
        %s290 = smul.addr %s289, 8
        %s291 = scalar_lea.vmem %s2, %s290
        %s292 = smul.u32 %s21, 2
        %s293 = sadd.s32 %s292, %s22
        %p294 = scmp.lt.s32.totalorder %s293, 2
        %s295 = scalar_select %p294, %s293, 2
        %p296 = scmp.eq.s32.totalorder %s22, 0
        // Predicated region
        $region33: #{tpu_custom_call.1} parent=31 // pred_check
          %p297 = pneg %p296
        $region34: #{tpu_custom_call.1} parent=31 // pred_check_branch
          %299 = sbr.rel (%p297) target = $region36
        $region35: #{tpu_custom_call.1} parent=31 // pred_region
          %vm300 = vcmask 7168
          %301 = vst.msk [vmem:[#allocation2] sm:$0xff] %vm300, 0.0
        $region36: #{tpu_custom_call.1} parent=31 // pred_fallthru
          _
        %s302 = smul.u32 %s21, 2
        %s303 = sadd.s32 %s302, %s22
        %s304 = smul.u32 %s303, 8
        %v305 = vlaneseq
        %v306 = vshrl.u32 %v305, 7
        %v307 = vstv %s304
        %v308 = vadd.s32 %v306, %v307
        %vm309 = vcmp.lt.s32.totalorder %v308, 20
        %v310 = vld [vmem:[%s267] sm:$0xff]
        %v311 = vsel %vm309, 1, 0
        %vm312 = vcmp.eq.s32.totalorder %v311, 1
        %v313 = vsel %vm312, %v310, 0.0
        %v314 = vld [vmem:[%s279] sm:$0xff]
        %v315 = vld [vmem:[%s291] sm:$0xff]
        %v316 = vsel %vm309, %v315, 0.0
        %v317 = vlaneseq
        %v318 = vand.u32 %v317, 127
        %319 = vset.pattern.permute.xlu0 0
        %320 = vperm.xlu0 %319, %v314
        %v321 = vpop.permute.xlu0 %320
        %vm322 = vcmp.eq.s32.totalorder %v318, %v321
        %vm323 = vcmask 130048
        %v324 = vsel %vm323, %v313, -inf
        %325 = vmax.xlane.f32.xlu0 %v324
        %v326 = vpop.xlane.xlu0 %325
        %v327 = vsub.f32 %v313, %v326
        %v328 = vmul.f32 %v327, 1.442695
        %v329 = vpow.pop %v328
        %v330 = vsel %vm323, %v329, 0.0
        %331 = vadd.xlane.f32.xlu0 %v330
        %v332 = vpop.xlane.xlu0 %331
        %v333 = vrcp.pop %v332
        %v334 = vmul.f32 1.0, %v333
        %v335 = vmul.f32 %v329, %v334
        %v336 = vlog2.pop %v332
        %v337 = vmul.f32 %v336, 0.6931472
        %v338 = vsel %vm322, %v335, 0.0
        %v339 = vsel %vm323, %v338, 0.0
        %340 = vadd.xlane.f32.xlu0 %v339
        %v341 = vpop.xlane.xlu0 %340
        %v342 = vsub.f32 1.0, %v341
        %v343 = vadd.f32 %v342, 1e-07
        %v344 = vlog2.pop %v343
        %v345 = vmul.f32 %v344, 0.6931472
        %v346 = vrcp.pop %v343
        %v347 = vmul.f32 1.0, %v346
        %v348 = vmul.f32 %v335, %v347
        %v349 = vsub.f32 %v327, %v337
        %v350 = vsub.f32 %v349, %v345
        %v351 = vmul.f32 %v348, %v350
        %v352 = vsel %vm322, 0.0, %v351
        %v353 = vsel %vm323, %v352, 0.0
        %354 = vadd.xlane.f32.xlu0 %v353
        %v355 = vpop.xlane.xlu0 %354
        %v356 = vmul.f32 %v355, 0.06666667
        %v357 = vmul.f32 %v335, 1.442695
        %v358 = vpow.pop %v357
        %v359 = vsel %vm323, %v358, 0.0
        %360 = vadd.xlane.f32.xlu0 %v359
        %v361 = vpop.xlane.xlu0 %360
        %v362 = vlog2.pop %v361
        %v363 = vmul.f32 %v362, 0.6931472
        %v364 = vsub.f32 %v363, %v341
        %v365 = vadd.f32 %v364, %v356
        %v366 = vmul.f32 %v365, %v316
        %v367 = vld [vmem:[#allocation2] sm:$0xff]
        %v368 = vsel %vm309, %v366, 0.0
        %v369 = vadd.f32 %v367, %v368
        %vm370 = vcmask 7168
        %371 = vst.msk [vmem:[#allocation2] sm:$0xff] %vm370, %v369
        %p372 = scmp.eq.s32.totalorder %s22, 1
        // Predicated region
        $region37: #{tpu_custom_call.1} parent=31 // pred_check
          %p373 = pneg %p372
        $region38: #{tpu_custom_call.1} parent=31 // pred_check_branch
          %375 = sbr.rel (%p373) target = $region40
        $region39: #{tpu_custom_call.1} parent=31 // pred_region
          %v376 = vld [vmem:[#allocation2] sm:$0xff]
          %v377 = vsel %vm370, %v376, 0.0
          %378 = vadd.xlane.f32.xlu0 %v377
          %v379 = vpop.xlane.xlu0 %378
          %v380 = vrot.slane %v379, 4
          %v381 = vadd.f32 %v379, %v380
          %v382 = vrot.slane %v381, 2
          %v383 = vadd.f32 %v381, %v382
          %v384 = vrot.slane %v383, 1
          %v385 = vadd.f32 %v383, %v384
          %s386 = vtos %v385
          %v387 = vstv %s386
          %v388 = vadd.f32 %v387, 0.0
          %389 = vst [vmem:[%s259] sm:$0xff] %v388
        $region40: #{tpu_custom_call.1} parent=31 // pred_fallthru
          _
        %s390 = sand.u32 %s139, 1
        %s391 = scalar_lea.sflag [#allocation4], %s390
        %s392 = sand.u32 %s139, 1
        %s393 = smul.addr %s392, 8
        %s394 = scalar_lea.vmem [#allocation3], %s393
        // Predicated region
        $region41: #{tpu_custom_call.1} parent=31 // pred_check
          %p395 = pneg %p149
        $region42: #{tpu_custom_call.1} parent=31 // pred_check_branch
          %397 = sbr.rel (%p395) target = $region44
        $region43: #{tpu_custom_call.1} parent=31 // pred_region
          %s399 = ssub.s32 128, 128
          %400 = vsyncadd %s391, %s399
          %s401 = smul.addr %s21, 128
          %s402 = scalar_lea.hbm %s3, %s401
          %s404 = sshll.u32 %s394, 4
          %s405 = int_to_ptr.vmem [resolvable:$true] %s404
          %407 = dma.vmem_to_hbm [thread:$0]  %s405, 128, %s402, %s391
        $region44: #{tpu_custom_call.1} parent=31 // pred_fallthru
          _
      $region32: #{tpu_custom_call.1} parent=5 // pred_fallthru
        _
      %p408 = scmp.le.s32.totalorder 2, %s12
      // Predicated region
      $region45: #{tpu_custom_call.1} parent=5 // pred_check
        %p409 = pneg %p408
      $region46: #{tpu_custom_call.1} parent=5 // pred_check_branch
        %411 = sbr.rel (%p409) target = $region48
      $region47: #{tpu_custom_call.1} parent=5 // pred_region
        %s412 = ssub.s32 %s12, 2
        // Predicated region
        $region49: #{tpu_custom_call.1} parent=47 // pred_check
          %p413 = pneg %p155
        $region50: #{tpu_custom_call.1} parent=47 // pred_check_branch
          %415 = sbr.rel (%p413) target = $region52
        $region51: #{tpu_custom_call.1} parent=47 // pred_region
          %s416 = sand.u32 %s140, 1
          %s417 = scalar_lea.sflag [#allocation4], %s416
          %s418 = sand.u32 %s140, 1
          %s419 = smul.addr %s418, 8
          %s420 = scalar_lea.vmem [#allocation3], %s419
          %421 = dma.done %s417, 128
        $region52: #{tpu_custom_call.1} parent=47 // pred_fallthru
          _
      $region48: #{tpu_custom_call.1} parent=5 // pred_fallthru
        _
    $region6: #{tpu_custom_call.1} parent=1 // loop_footer
      %s16 = sadd.s32 1, %s12
    $region7: #{tpu_custom_call.1} parent=1 // loop_footer_branch
      %11 = sbr.rel target = $region3
    $region8: #{tpu_custom_call.1} parent=1 // loop_exit
      _
    %422 = vsyncpa [#allocation4], 1
    %s423 = scalar_lea.sflag [#allocation4], 1
    %424 = vsyncpa %s423, 1

</llo_original>
